<compile_context>
chip_gen: v7x
topology: tpu7x:2x2x1
jax: 0.10.0
libtpu: 0.0.40
codegen_flags: <defaults>
</compile_context>

<pallas_src>
import jax
import jax.numpy as jnp
from jax import lax
from jax.experimental import pallas as pl
from jax.experimental.pallas import tpu as pltpu


# ---------------------------------------------------------------------------
# Problem sizes (small, but consistent with the module: laser_dim hardcoded 720)
# ---------------------------------------------------------------------------
HISTORY_LENGTH = 1
STATE_DIM      = 724                   # per-step state dim (> 720 so feature_dim > 0)
ACTION_DIM     = 2
HEAD_FEAT      = 128                   # head.feature_dim
LASER_RAW      = 720
FEATURE_RAW    = STATE_DIM - LASER_RAW               # 4
DETERMINISTIC  = False
LASER_DIM      = LASER_RAW * (1 if DETERMINISTIC else 2)     # 1440
FEATURE_DIM    = FEATURE_RAW * (1 if DETERMINISTIC else 2)   # 8
LS_HALF        = LASER_DIM // 2                              # 720
FS_HALF        = FEATURE_DIM // 2                            # 4
S_OUT          = LASER_DIM + FEATURE_DIM                     # 1448 (final state width)
S_OUT_PAD      = 1536                                        # lane-dense, 256-aligned
REWARD_COL     = S_OUT                                       # 1448 (packed into padding)
DONE_COL       = S_OUT + 1                                   # 1449 (packed into padding)

HEAD_IN        = STATE_DIM + ACTION_DIM                      # 726
HEAD_IN_PAD    = 768                                         # 128-aligned contraction K

COL_BLOCK      = 768                                         # fused-output column tile
NUM_COL_BLOCKS = S_OUT_PAD // COL_BLOCK                      # 2 ("parallel" -> v7x TCs)
TAIL_START     = S_OUT_PAD - 128                             # 1408 (last 128-lane slice)

BATCH          = 8


# ---------------------------------------------------------------------------
# Pallas kernel: one head MLP + one fused output projection per column block.
#   Fused-output column layout (already in the FINAL interleaved order):
#     [0, 720)       -> laser first half   (tanh)
#     [720, 724)     -> feature first half (identity)
#     [724, 1444)    -> laser second half  (tanh)
#     [1444, 1448)   -> feature second half(identity)
#     [1448]         -> reward             (identity)
#     [1449]         -> sigmoid(done)
#     [1450, 1536)   -> zero padding
# ---------------------------------------------------------------------------
def _model_fwd_kernel(x_ref, wh_ref, bh_ref, ws_ref, bs_ref, s_out_ref):
    j = pl.program_id(1)                      # column-block index

    # head: x = tanh([state|action|0] @ W_head + b)   (K = 768, 128-aligned)
    xin = x_ref[...].astype(jnp.bfloat16)
    h = jnp.dot(xin, wh_ref[...], preferred_element_type=jnp.float32) + bh_ref[...]
    x = jnp.tanh(h).astype(jnp.bfloat16)

    # fused output head: this grid step's 768-wide column block
    y = jnp.dot(x, ws_ref[...], preferred_element_type=jnp.float32) + bs_ref[...]

    cols = lax.broadcasted_iota(jnp.int32, y.shape, 1) + j * COL_BLOCK
    is_tanh = (cols < LS_HALF) | ((cols >= LS_HALF + FS_HALF) &
                                  (cols < LS_HALF + FS_HALF + LS_HALF))
    out = jnp.where(is_tanh, jnp.tanh(y), y)
    s_out_ref[...] = out

    # sigmoid only over the last 128 lanes (which contain the done column, 1449)
    @pl.when(j == NUM_COL_BLOCKS - 1)
    def _():
        tail_lo = COL_BLOCK - 128
        tail_y = y[:, tail_lo:]
        tcols = lax.broadcasted_iota(jnp.int32, tail_y.shape, 1) + TAIL_START
        tail = jnp.where(tcols == DONE_COL, jax.nn.sigmoid(tail_y), out[:, tail_lo:])
        s_out_ref[:, tail_lo:] = tail


def model_forward(state, action, kernel_params):
    """Pallas-backed forward. state: (B, STATE_DIM), action: (B, ACTION_DIM)."""
    wh, bh, ws, bs = kernel_params
    B = state.shape[0]

    # single lane-padded head input: [state(724) | action(2) | zeros(42)]
    x_in = jnp.concatenate([state, action], axis=1)
    x_in = jnp.pad(x_in, ((0, 0), (0, HEAD_IN_PAD - HEAD_IN)))

    # keep the whole (tiny) batch in one tile; cap at 512 rows if batch ever grows
    TB = B if B <= 512 else 512
    grid = (pl.cdiv(B, TB), NUM_COL_BLOCKS)

    s_pad = pl.pallas_call(
        _model_fwd_kernel,
        grid=grid,
        out_shape=jax.ShapeDtypeStruct((B, S_OUT_PAD), jnp.float32),
        in_specs=[
            pl.BlockSpec((TB, HEAD_IN_PAD),          lambda i, j: (i, 0)),  # [state|action|0]
            pl.BlockSpec((HEAD_IN_PAD, HEAD_FEAT),   lambda i, j: (0, 0)),  # W_head (bf16)
            pl.BlockSpec((1, HEAD_FEAT),             lambda i, j: (0, 0)),  # b_head (f32)
            pl.BlockSpec((HEAD_FEAT, COL_BLOCK),     lambda i, j: (0, j)),  # fused W (bf16)
            pl.BlockSpec((1, COL_BLOCK),             lambda i, j: (0, j)),  # fused b (f32)
        ],
        out_specs=pl.BlockSpec((TB, COL_BLOCK), lambda i, j: (i, j)),
        compiler_params=pltpu.CompilerParams(
            dimension_semantics=("parallel", "parallel")),
    )(x_in, wh, bh, ws, bs)

    # kernel output is already in the final interleaved order; r/d live in padding cols
    s = s_pad[:, :S_OUT]
    r = s_pad[:, REWARD_COL:REWARD_COL + 1]
    d = s_pad[:, DONE_COL:DONE_COL + 1]
    return s, r, d


# ---------------------------------------------------------------------------
# Deterministic parameter construction (synthetic; mirrors nn.Linear shapes)
# ---------------------------------------------------------------------------
def make_params(key):
    k = jax.random.split(key, 10)

    def lin(kw, kb, fan_in, fan_out):
        lim = 1.0 / (float(fan_in) ** 0.5)
        w = jax.random.uniform(kw, (fan_in, fan_out), jnp.float32, -lim, lim)
        b = jax.random.uniform(kb, (1, fan_out), jnp.float32, -lim, lim)
        return w, b

    w_head, b_head = lin(k[0], k[1], HEAD_IN, HEAD_FEAT)
    w_ls, b_ls     = lin(k[2], k[3], HEAD_FEAT, LASER_DIM)
    w_fs, b_fs     = lin(k[4], k[5], HEAD_FEAT, FEATURE_DIM)
    w_r,  b_r      = lin(k[6], k[7], HEAD_FEAT, 1)
    w_d,  b_d      = lin(k[8], k[9], HEAD_FEAT, 1)

    # weights streamed in bf16 (biases stay f32)
    w_head_b = w_head.astype(jnp.bfloat16)
    w_ls_b   = w_ls.astype(jnp.bfloat16)
    w_fs_b   = w_fs.astype(jnp.bfloat16)
    w_r_b    = w_r.astype(jnp.bfloat16)
    w_d_b    = w_d.astype(jnp.bfloat16)

    # head weight: rows [0,726) = [state|action] weight, rows [726,768) zero padding
    wh = jnp.zeros((HEAD_IN_PAD, HEAD_FEAT), jnp.bfloat16)
    wh = wh.at[:HEAD_IN].set(w_head_b)

    # fused output head: columns pre-reordered to the final interleaved order, with
    # reward/done packed into padding columns 1448/1449, rest zero padding.
    ws = jnp.zeros((HEAD_FEAT, S_OUT_PAD), jnp.bfloat16)
    ws = ws.at[:, 0:LS_HALF].set(w_ls_b[:, :LS_HALF])
    ws = ws.at[:, LS_HALF:LS_HALF + FS_HALF].set(w_fs_b[:, :FS_HALF])
    ws = ws.at[:, LS_HALF + FS_HALF:2 * LS_HALF + FS_HALF].set(w_ls_b[:, LS_HALF:])
    ws = ws.at[:, 2 * LS_HALF + FS_HALF:S_OUT].set(w_fs_b[:, FS_HALF:])
    ws = ws.at[:, REWARD_COL:REWARD_COL + 1].set(w_r_b)
    ws = ws.at[:, DONE_COL:DONE_COL + 1].set(w_d_b)

    bs = jnp.zeros((1, S_OUT_PAD), jnp.float32)
    bs = bs.at[:, 0:LS_HALF].set(b_ls[:, :LS_HALF])
    bs = bs.at[:, LS_HALF:LS_HALF + FS_HALF].set(b_fs[:, :FS_HALF])
    bs = bs.at[:, LS_HALF + FS_HALF:2 * LS_HALF + FS_HALF].set(b_ls[:, LS_HALF:])
    bs = bs.at[:, 2 * LS_HALF + FS_HALF:S_OUT].set(b_fs[:, FS_HALF:])
    bs = bs.at[:, REWARD_COL:REWARD_COL + 1].set(b_r)
    bs = bs.at[:, DONE_COL:DONE_COL + 1].set(b_d)

    kernel_params = (wh, b_head, ws, bs)

    # reference params: bf16-rounded weights back in f32, original (unfused) layout,
    # so the only numerical difference vs. the kernel is matmul / input precision.
    ref_params = (w_head_b.astype(jnp.float32), b_head,
                  w_ls_b.astype(jnp.float32), b_ls,
                  w_fs_b.astype(jnp.float32), b_fs,
                  w_r_b.astype(jnp.float32), b_r,
                  w_d_b.astype(jnp.float32), b_d)
    return kernel_params, ref_params


# ---------------------------------------------------------------------------
# Pure-JAX reference (mirrors the PyTorch forward exactly; exercises the
# column-reorder / reward-done packing independently)
# ---------------------------------------------------------------------------
def reference_forward(state, action, ref_params):
    (w_head, b_head, w_ls, b_ls, w_fs, b_fs, w_r, b_r, w_d, b_d) = ref_params
    sa = jnp.concatenate([state, action], axis=1)
    x = jnp.tanh(sa @ w_head + b_head)
    ls = jnp.tanh(x @ w_ls + b_ls)
    fs = x @ w_fs + b_fs
    r  = x @ w_r + b_r
    d  = jax.nn.sigmoid(x @ w_d + b_d)
    if DETERMINISTIC:
        s = jnp.concatenate([ls, fs], axis=1)
    else:
        s = jnp.concatenate(
            [ls[:, :LASER_DIM // 2], fs[:, :FEATURE_DIM // 2],
             ls[:, LASER_DIM // 2:], fs[:, FEATURE_DIM // 2:]],
            axis=1,
        )
    return s, r, d


if __name__ == "__main__":
    key = jax.random.PRNGKey(0)
    k_state, k_action, k_params = jax.random.split(key, 3)

    state  = jax.random.normal(k_state,  (BATCH, STATE_DIM),  jnp.float32)
    action = jax.random.normal(k_action, (BATCH, ACTION_DIM), jnp.float32)
    kernel_params, ref_params = make_params(k_params)

    s, r, d = jax.jit(model_forward)(state, action, kernel_params)
    jax.block_until_ready((s, r, d))

    s_ref, r_ref, d_ref = reference_forward(state, action, ref_params)

    assert s.shape == (BATCH, LASER_DIM + FEATURE_DIM)
    assert r.shape == (BATCH, 1) and d.shape == (BATCH, 1)
    # bf16 weight/input streaming on the MXU -> loosened tolerance vs. f32 reference
    assert jnp.allclose(s, s_ref, atol=3e-2, rtol=3e-2)
    assert jnp.allclose(r, r_ref, atol=3e-2, rtol=3e-2)
    assert jnp.allclose(d, d_ref, atol=3e-2, rtol=3e-2)

    # TODO(synk): Model.sample() (Normal reparameterized sampling over mean/logvar
    # halves) is host/JAX-level RNG logic and is intentionally not implemented in-kernel.
    print("KERNEL_OK")
</pallas_src>

<mosaic_0001>
module attributes {stable_mosaic.version = 11 : i64} {
  func.func @_model_fwd_kernel(%arg0: i32, %arg1: i32, %arg2: memref<8x768xf32, #tpu.memory_space<vmem>>, %arg3: memref<768x128xbf16, #tpu.memory_space<vmem>>, %arg4: memref<1x128xf32, #tpu.memory_space<vmem>>, %arg5: memref<128x768xbf16, #tpu.memory_space<vmem>>, %arg6: memref<1x768xf32, #tpu.memory_space<vmem>>, %arg7: memref<8x768xf32, #tpu.memory_space<vmem>>) attributes {dimension_semantics = [#tpu.dimension_semantics<parallel>, #tpu.dimension_semantics<parallel>], iteration_bounds = array<i64: 1, 2>, scalar_prefetch = 0 : i64, scratch_operands = 0 : i64, tpu.core_type = #tpu.core_type<tc>, window_params = [{transform_indices = @transform_0, window_bounds = array<i64: 8, 768>}, {pipeline_mode = #tpu.pipeline_mode<synchronous>, transform_indices = @transform_1, window_bounds = array<i64: 768, 128>}, {pipeline_mode = #tpu.pipeline_mode<synchronous>, transform_indices = @transform_2, window_bounds = array<i64: 1, 128>}, {transform_indices = @transform_3, window_bounds = array<i64: 128, 768>}, {transform_indices = @transform_4, window_bounds = array<i64: 1, 768>}, {transform_indices = @transform_5, window_bounds = array<i64: 8, 768>}]} {
    %c0 = arith.constant 0 : index
    %c0_0 = arith.constant 0 : index
    %0 = vector.load %arg2[%c0, %c0_0] : memref<8x768xf32, #tpu.memory_space<vmem>>, vector<8x768xf32>
    %1 = arith.truncf %0 : vector<8x768xf32> to vector<8x768xbf16>
    %c0_1 = arith.constant 0 : index
    %c0_2 = arith.constant 0 : index
    %2 = vector.load %arg3[%c0_1, %c0_2] : memref<768x128xbf16, #tpu.memory_space<vmem>>, vector<768x128xbf16>
    %cst = arith.constant dense<0.000000e+00> : vector<8x128xf32>
    %3 = tpu.matmul %1, %2, %cst {dimension_numbers = #tpu.dot_dimension_numbers<[1], [0], [0], [1], [0, 0, 1, 1], [], []>} : vector<8x768xbf16>, vector<768x128xbf16>, vector<8x128xf32> -> vector<8x128xf32>
    %c0_3 = arith.constant 0 : index
    %c0_4 = arith.constant 0 : index
    %4 = vector.load %arg4[%c0_3, %c0_4] : memref<1x128xf32, #tpu.memory_space<vmem>>, vector<1x128xf32>
    %5 = vector.broadcast %4 : vector<1x128xf32> to vector<8x128xf32>
    %6 = arith.addf %3, %5 : vector<8x128xf32>
    %7 = math.tanh %6 : vector<8x128xf32>
    %8 = arith.truncf %7 : vector<8x128xf32> to vector<8x128xbf16>
    %c0_5 = arith.constant 0 : index
    %c0_6 = arith.constant 0 : index
    %9 = vector.load %arg5[%c0_5, %c0_6] : memref<128x768xbf16, #tpu.memory_space<vmem>>, vector<128x768xbf16>
    %cst_7 = arith.constant dense<0.000000e+00> : vector<8x768xf32>
    %10 = tpu.matmul %8, %9, %cst_7 {dimension_numbers = #tpu.dot_dimension_numbers<[1], [0], [0], [1], [0, 0, 1, 1], [], []>} : vector<8x128xbf16>, vector<128x768xbf16>, vector<8x768xf32> -> vector<8x768xf32>
    %c0_8 = arith.constant 0 : index
    %c0_9 = arith.constant 0 : index
    %11 = vector.load %arg6[%c0_8, %c0_9] : memref<1x768xf32, #tpu.memory_space<vmem>>, vector<1x768xf32>
    %12 = vector.broadcast %11 : vector<1x768xf32> to vector<8x768xf32>
    %13 = arith.addf %10, %12 : vector<8x768xf32>
    %14 = tpu.iota {dimensions = array<i32: 1>} : vector<8x768xi32>
    %c768_i32 = arith.constant 768 : i32
    %15 = arith.muli %arg1, %c768_i32 : i32
    %16 = vector.broadcast %15 : i32 to vector<8x768xi32>
    %17 = arith.addi %14, %16 : vector<8x768xi32>
    %c720_i32 = arith.constant 720 : i32
    %18 = vector.broadcast %c720_i32 : i32 to vector<8x768xi32>
    %19 = arith.cmpi slt, %17, %18 : vector<8x768xi32>
    %c724_i32 = arith.constant 724 : i32
    %20 = vector.broadcast %c724_i32 : i32 to vector<8x768xi32>
    %21 = arith.cmpi sge, %17, %20 : vector<8x768xi32>
    %c1444_i32 = arith.constant 1444 : i32
    %22 = vector.broadcast %c1444_i32 : i32 to vector<8x768xi32>
    %23 = arith.cmpi slt, %17, %22 : vector<8x768xi32>
    %24 = arith.andi %21, %23 : vector<8x768xi1>
    %25 = arith.ori %19, %24 : vector<8x768xi1>
    %26 = math.tanh %13 : vector<8x768xf32>
    %27 = arith.select %25, %26, %13 : vector<8x768xi1>, vector<8x768xf32>
    %c0_10 = arith.constant 0 : index
    %c0_11 = arith.constant 0 : index
    %28 = vector.load %arg7[%c0_10, %c0_11] : memref<8x768xf32, #tpu.memory_space<vmem>>, vector<8x768xf32>
    tpu.vector_store %arg7[%c0_10, %c0_11], %27 {strides = array<i32>} : memref<8x768xf32, #tpu.memory_space<vmem>>, vector<8x768xf32>,
    %c1_i32 = arith.constant 1 : i32
    %29 = arith.cmpi eq, %arg1, %c1_i32 : i32
    %30 = arith.extui %29 : i1 to i32
    %c0_i32 = arith.constant 0 : i32
    %31 = arith.cmpi ne, %30, %c0_i32 : i32
    scf.if %31 {
      %32 = vector.extract_strided_slice %13 {offsets = [0, 640], sizes = [8, 128], strides = [1, 1]} : vector<8x768xf32> to vector<8x128xf32>
      %33 = tpu.iota {dimensions = array<i32: 1>} : vector<8x128xi32>
      %c1408_i32 = arith.constant 1408 : i32
      %34 = vector.broadcast %c1408_i32 : i32 to vector<8x128xi32>
      %35 = arith.addi %33, %34 : vector<8x128xi32>
      %c1449_i32 = arith.constant 1449 : i32
      %36 = vector.broadcast %c1449_i32 : i32 to vector<8x128xi32>
      %37 = arith.cmpi eq, %35, %36 : vector<8x128xi32>
      %38 = arith.negf %32 : vector<8x128xf32>
      %39 = math.exp %38 : vector<8x128xf32>
      %cst_12 = arith.constant 1.000000e+00 : f32
      %40 = vector.broadcast %cst_12 : f32 to vector<8x128xf32>
      %41 = arith.addf %40, %39 : vector<8x128xf32>
      %42 = arith.divf %40, %41 : vector<8x128xf32>
      %43 = vector.extract_strided_slice %27 {offsets = [0, 640], sizes = [8, 128], strides = [1, 1]} : vector<8x768xf32> to vector<8x128xf32>
      %44 = arith.select %37, %42, %43 : vector<8x128xi1>, vector<8x128xf32>
      %c0_13 = arith.constant 0 : index
      %c640 = arith.constant 640 : index
      %45 = vector.load %arg7[%c0_13, %c640] : memref<8x768xf32, #tpu.memory_space<vmem>>, vector<8x128xf32>
      tpu.vector_store %arg7[%c0_13, %c640], %44 {strides = array<i32>} : memref<8x768xf32, #tpu.memory_space<vmem>>, vector<8x128xf32>,
    } else {
    }
    return
  }
  func.func @transform_0(%arg0: i32, %arg1: i32) -> (i32, i32) {
    %c0_i32 = arith.constant 0 : i32
    %c0_i32_0 = arith.constant 0 : i32
    return %arg0, %c0_i32 : i32, i32
  }
  func.func @transform_1(%arg0: i32, %arg1: i32) -> (i32, i32) {
    %c0_i32 = arith.constant 0 : i32
    %c0_i32_0 = arith.constant 0 : i32
    %c0_i32_1 = arith.constant 0 : i32
    return %c0_i32, %c0_i32_0 : i32, i32
  }
  func.func @transform_2(%arg0: i32, %arg1: i32) -> (i32, i32) {
    %c0_i32 = arith.constant 0 : i32
    %c0_i32_0 = arith.constant 0 : i32
    %c0_i32_1 = arith.constant 0 : i32
    return %c0_i32, %c0_i32_0 : i32, i32
  }
  func.func @transform_3(%arg0: i32, %arg1: i32) -> (i32, i32) {
    %c0_i32 = arith.constant 0 : i32
    %c0_i32_0 = arith.constant 0 : i32
    return %c0_i32, %arg1 : i32, i32
  }
  func.func @transform_4(%arg0: i32, %arg1: i32) -> (i32, i32) {
    %c0_i32 = arith.constant 0 : i32
    %c0_i32_0 = arith.constant 0 : i32
    return %c0_i32, %arg1 : i32, i32
  }
  func.func @transform_5(%arg0: i32, %arg1: i32) -> (i32, i32) {
    %c0_i32 = arith.constant 0 : i32
    return %arg0, %arg1 : i32, i32
  }
}

</mosaic_0001>

<llo_original>
// kernel: model_forward.1
$region0: #{model_forward.1}
  #allocation0 [shape = 'u32[]', space=smem, size = 0x4, offset = 0x4, fixed_abs, tag = 'smem constant byte address 0x4 - core index']
  #allocation1 [shape = 'u32[144,128]{1,0:T(1,128)}', space=vmem, size = 0x12000, scoped, tag = 'internal scratch']
  %s0 = inlined_call_operand.vmem [shape: f32[8,768], index: 0, kind: input, shape index: {}]
  %s1 = inlined_call_operand.hbm [shape: bf16[768,128], index: 1, kind: input, shape index: {}]
  %s2 = inlined_call_operand.vmem [shape: f32[1,128], index: 2, kind: input, shape index: {}]
  %s3 = inlined_call_operand.hbm [shape: bf16[128,1536], index: 3, kind: input, shape index: {}]
  %s4 = inlined_call_operand.vmem [shape: f32[1,1536], index: 4, kind: input, shape index: {}]
  %s5 = inlined_call_operand.vmem [shape: f32[8,1536], index: 5, kind: output, shape index: {}]
  %s6 = sld [smem:[#allocation0]]
  $region65: #{model_forward.1} parent=0
    _
  %s8 = ssub.s32 1, %s6
  %s9 = scalar_select 0, %s8, %s6
  $region1: #{model_forward.1} parent=0
    #allocation2 [shape = 'u8[196608]{0}', space=vmem, size = 0x30000, scoped, tag = 'input window, operand 1, single buffered']
    #allocation3 [shape = 's32[2]{0}', space=sflag, size = 0x8, scoped, tag = 'scoped memory for model_forward.1']
    #allocation4 [shape = 'u8[393216]{0}', space=vmem, size = 0x60000, scoped, tag = 'input window, operand 3']
    #allocation5 [shape = 's32[2]{0}', space=sflag, size = 0x8, scoped, tag = 'scoped memory for model_forward.1']
    %10 = vsyncpa [#allocation3], 0
    %11 = vsyncpa [#allocation5], 0
    %s12 = scalar_lea.sflag [#allocation5], 1
    %13 = vsyncpa %s12, 0
    loop: start=0, step=1, limit=4
    $region2: #{model_forward.1} parent=1 // loop_pre_header
      _
    $region3: #{model_forward.1} parent=1 // loop_header
      %s15 = sphi 0, %s19
      %p16 = scmp.ge.s32.totalorder %s15, 4
      %s22 = sphi 0, %s34
      %s23 = sphi 0, %s30
      %s24 = sphi 0, %s22
      %s25 = sphi 0, %s23
      %s26 = sphi 0, %s24
      %s27 = sphi 0, %s25
      %s37 = sphi 0, %s39
      %s40 = sphi 0, %s37
      %s41 = sphi 0, %s40
      %s57 = sphi 0, %s41
      %s61 = sphi 0, %s61
      %s63 = sphi 0, %s61
      %s64 = sphi 0, %s63
      %s78 = sphi 0, %s64
      %s82 = sphi 0, %s82
      %s84 = sphi 0, %s82
      %s85 = sphi 0, %s84
      %s99 = sphi 0, %s85
      %s105 = sphi 0, %s107
      %s108 = sphi 0, %s105
      %s109 = sphi 0, %s108
      %s125 = sphi 0, %s109
      %s131 = sphi 0, %s133
      %s134 = sphi 0, %s131
      %s135 = sphi 0, %s134
      %s151 = sphi 0, %s135
      %s159 = sphi 0, %s161
      %s162 = sphi 0, %s159
      %s163 = sphi 0, %s162
      %s179 = sphi 0, %s163
    $region4: #{model_forward.1} parent=1 // loop_header_branch
      %18 = sbr.rel (%p16) target = $region8
    $region5: #{model_forward.1} parent=1 // loop_body
      %s20 = ssub.s32 %s15, 1
      %s21 = ssub.s32 %s15, 2
      %s28 = sadd.s32 1, %s23
      %p29 = scmp.ge.s32.totalorder %s28, 2
      %s30 = scalar_select %p29, 0, %s28
      %s31 = sadd.s32 1, %s22
      %s32 = scalar_select %p29, %s31, %s22
      %p33 = scmp.ge.s32.totalorder %s32, 1
      %s34 = scalar_select %p33, 0, %s32
      %s35 = ssub.s32 %s22, %s34
      %p36 = scmp.eq.s32.totalorder %s35, 0
      %s38 = sadd.s32 %s37, 1
      %s39 = scalar_select %p36, %s37, %s38
      %p42 = pneg %p36
      %p43 = scmp.eq.s32.totalorder %s15, 1
      %p44 = por %p42, %p43
      %p45 = scmp.ne.s32.totalorder %s37, %s40
      %p46 = scmp.eq.s32.totalorder %s15, 0
      %p47 = por %p45, %p46
      %p48 = scmp.ne.s32.totalorder %s37, %s40
      %p49 = scmp.eq.s32.totalorder %s20, 1
      %p50 = por %p48, %p49
      %p51 = scmp.ne.s32.totalorder %s40, %s41
      %p52 = scmp.eq.s32.totalorder %s20, 0
      %p53 = por %p51, %p52
      %p54 = scmp.ne.s32.totalorder %s40, %s41
      %p55 = scmp.eq.s32.totalorder %s21, 1
      %p56 = por %p54, %p55
      %p58 = scmp.ne.s32.totalorder %s41, %s57
      %p59 = scmp.eq.s32.totalorder %s21, 0
      %p60 = por %p58, %p59
      %s62 = sadd.s32 %s61, 1
      %p65 = scmp.eq.s32.totalorder %s15, 1
      %p66 = scmp.ne.s32.totalorder %s61, %s63
      %p67 = scmp.eq.s32.totalorder %s15, 0
      %p68 = por %p66, %p67
      %p69 = scmp.ne.s32.totalorder %s61, %s63
      %p70 = scmp.eq.s32.totalorder %s20, 1
      %p71 = por %p69, %p70
      %p72 = scmp.ne.s32.totalorder %s63, %s64
      %p73 = scmp.eq.s32.totalorder %s20, 0
      %p74 = por %p72, %p73
      %p75 = scmp.ne.s32.totalorder %s63, %s64
      %p76 = scmp.eq.s32.totalorder %s21, 1
      %p77 = por %p75, %p76
      %p79 = scmp.ne.s32.totalorder %s64, %s78
      %p80 = scmp.eq.s32.totalorder %s21, 0
      %p81 = por %p79, %p80
      %s83 = sadd.s32 %s82, 1
      %p86 = scmp.eq.s32.totalorder %s15, 1
      %p87 = scmp.ne.s32.totalorder %s82, %s84
      %p88 = scmp.eq.s32.totalorder %s15, 0
      %p89 = por %p87, %p88
      %p90 = scmp.ne.s32.totalorder %s82, %s84
      %p91 = scmp.eq.s32.totalorder %s20, 1
      %p92 = por %p90, %p91
      %p93 = scmp.ne.s32.totalorder %s84, %s85
      %p94 = scmp.eq.s32.totalorder %s20, 0
      %p95 = por %p93, %p94
      %p96 = scmp.ne.s32.totalorder %s84, %s85
      %p97 = scmp.eq.s32.totalorder %s21, 1
      %p98 = por %p96, %p97
      %p100 = scmp.ne.s32.totalorder %s85, %s99
      %p101 = scmp.eq.s32.totalorder %s21, 0
      %p102 = por %p100, %p101
      %s103 = ssub.s32 %s23, %s30
      %p104 = scmp.eq.s32.totalorder %s103, 0
      %s106 = sadd.s32 %s105, 1
      %s107 = scalar_select %p104, %s105, %s106
      %p110 = pneg %p104
      %p111 = scmp.eq.s32.totalorder %s15, 1
      %p112 = por %p110, %p111
      %p113 = scmp.ne.s32.totalorder %s105, %s108
      %p114 = scmp.eq.s32.totalorder %s15, 0
      %p115 = por %p113, %p114
      %p116 = scmp.ne.s32.totalorder %s105, %s108
      %p117 = scmp.eq.s32.totalorder %s20, 1
      %p118 = por %p116, %p117
      %p119 = scmp.ne.s32.totalorder %s108, %s109
      %p120 = scmp.eq.s32.totalorder %s20, 0
      %p121 = por %p119, %p120
      %p122 = scmp.ne.s32.totalorder %s108, %s109
      %p123 = scmp.eq.s32.totalorder %s21, 1
      %p124 = por %p122, %p123
      %p126 = scmp.ne.s32.totalorder %s109, %s125
      %p127 = scmp.eq.s32.totalorder %s21, 0
      %p128 = por %p126, %p127
      %s129 = ssub.s32 %s23, %s30
      %p130 = scmp.eq.s32.totalorder %s129, 0
      %s132 = sadd.s32 %s131, 1
      %s133 = scalar_select %p130, %s131, %s132
      %p136 = pneg %p130
      %p137 = scmp.eq.s32.totalorder %s15, 1
      %p138 = por %p136, %p137
      %p139 = scmp.ne.s32.totalorder %s131, %s134
      %p140 = scmp.eq.s32.totalorder %s15, 0
      %p141 = por %p139, %p140
      %p142 = scmp.ne.s32.totalorder %s131, %s134
      %p143 = scmp.eq.s32.totalorder %s20, 1
      %p144 = por %p142, %p143
      %p145 = scmp.ne.s32.totalorder %s134, %s135
      %p146 = scmp.eq.s32.totalorder %s20, 0
      %p147 = por %p145, %p146
      %p148 = scmp.ne.s32.totalorder %s134, %s135
      %p149 = scmp.eq.s32.totalorder %s21, 1
      %p150 = por %p148, %p149
      %p152 = scmp.ne.s32.totalorder %s135, %s151
      %p153 = scmp.eq.s32.totalorder %s21, 0
      %p154 = por %p152, %p153
      %s155 = ssub.s32 %s22, %s34
      %s156 = ssub.s32 %s23, %s30
      %s157 = sor.u32 %s155, %s156
      %p158 = scmp.eq.s32.totalorder %s157, 0
      %s160 = sadd.s32 %s159, 1
      %s161 = scalar_select %p158, %s159, %s160
      %p164 = pneg %p158
      %p165 = scmp.eq.s32.totalorder %s15, 1
      %p166 = por %p164, %p165
      %p167 = scmp.ne.s32.totalorder %s159, %s162
      %p168 = scmp.eq.s32.totalorder %s15, 0
      %p169 = por %p167, %p168
      %p170 = scmp.ne.s32.totalorder %s159, %s162
      %p171 = scmp.eq.s32.totalorder %s20, 1
      %p172 = por %p170, %p171
      %p173 = scmp.ne.s32.totalorder %s162, %s163
      %p174 = scmp.eq.s32.totalorder %s20, 0
      %p175 = por %p173, %p174
      %p176 = scmp.ne.s32.totalorder %s162, %s163
      %p177 = scmp.eq.s32.totalorder %s21, 1
      %p178 = por %p176, %p177
      %p180 = scmp.ne.s32.totalorder %s163, %s179
      %p181 = scmp.eq.s32.totalorder %s21, 0
      %p182 = por %p180, %p181
      %p183 = scmp.le.s32.totalorder 1, %s15
      %p184 = scmp.lt.s32.totalorder %s15, 3
      %p185 = pnand %p183, %p184
      %p186 = pneg %p185
      // Predicated region
      $region9: #{model_forward.1} parent=5 // pred_check
        _
      $region10: #{model_forward.1} parent=5 // pred_check_branch
        %188 = sbr.rel (%p185) target = $region12
      $region11: #{model_forward.1} parent=5 // pred_region
        %s189 = ssub.s32 %s15, 1
        // Predicated region
        $region13: #{model_forward.1} parent=11 // pred_check
          %p190 = pneg %p53
        $region14: #{model_forward.1} parent=11 // pred_check_branch
          %192 = sbr.rel (%p190) target = $region16
        $region15: #{model_forward.1} parent=11 // pred_region
          %p193 = scmp.lt.s32.totalorder %s24, 0
          %s194 = scalar_select %p193, %s24, 0
          %s195 = smul.addr %s194, 6
          %s196 = smul.addr %s195, 8
          %s197 = scalar_lea.vmem %s0, %s196
        $region16: #{model_forward.1} parent=11 // pred_fallthru
          _
        // Predicated region
        $region17: #{model_forward.1} parent=11 // pred_check
          %p198 = pneg %p74
        $region18: #{model_forward.1} parent=11 // pred_check_branch
          %200 = sbr.rel (%p198) target = $region20
        $region19: #{model_forward.1} parent=11 // pred_region
          %s202 = ssub.s32 6144, 6144
          %203 = vsyncadd [#allocation3], %s202
          %s204 = sshll.u32 [#allocation2], 4
          %s205 = int_to_ptr.vmem [resolvable:$true] %s204
          %210 = dma.hbm_to_vmem [thread:$0]  %s1, 6144, %s205, [#allocation3], 64, 64, 4
        $region20: #{model_forward.1} parent=11 // pred_fallthru
          _
        // Predicated region
        $region21: #{model_forward.1} parent=11 // pred_check
          %p211 = pneg %p95
        $region22: #{model_forward.1} parent=11 // pred_check_branch
          %213 = sbr.rel (%p211) target = $region24
        $region23: #{model_forward.1} parent=11 // pred_region
          _
        $region24: #{model_forward.1} parent=11 // pred_fallthru
          _
      $region12: #{model_forward.1} parent=5 // pred_fallthru
        _
      %p214 = scmp.lt.s32.totalorder %s15, 2
      // Predicated region
      $region25: #{model_forward.1} parent=5 // pred_check
        %p215 = pneg %p214
      $region26: #{model_forward.1} parent=5 // pred_check_branch
        %217 = sbr.rel (%p215) target = $region28
      $region27: #{model_forward.1} parent=5 // pred_region
        // Predicated region
        $region29: #{model_forward.1} parent=27 // pred_check
          %p218 = pneg %p115
        $region30: #{model_forward.1} parent=27 // pred_check_branch
          %220 = sbr.rel (%p218) target = $region32
        $region31: #{model_forward.1} parent=27 // pred_region
          %s221 = sand.u32 %s105, 1
          %s222 = scalar_lea.sflag [#allocation5], %s221
          %s223 = sand.u32 %s105, 1
          %s224 = smul.addr %s223, 384
          %s225 = scalar_lea.vmem [#allocation4], %s224
          %s226 = smul.u32 6, %s23
          %s228 = ssub.s32 6144, 6144
          %229 = vsyncadd %s222, %s228
          %s230 = smul.addr %s226, 64
          %s231 = scalar_lea.hbm %s3, %s230
          %s232 = sshll.u32 %s225, 4
          %s233 = int_to_ptr.vmem [resolvable:$true] %s232
          %238 = dma.hbm_to_vmem [thread:$0]  %s231, 6144, %s233, %s222, 768, 384, 24
        $region32: #{model_forward.1} parent=27 // pred_fallthru
          _
        // Predicated region
        $region33: #{model_forward.1} parent=27 // pred_check
          %p239 = pneg %p141
        $region34: #{model_forward.1} parent=27 // pred_check_branch
          %241 = sbr.rel (%p239) target = $region36
        $region35: #{model_forward.1} parent=27 // pred_region
          %s242 = smul.u32 6, %s23
          %p243 = scmp.lt.s32.totalorder %s242, 11
          %s244 = scalar_select %p243, %s242, 11
          %s245 = scalar_lea.vmem %s4, %s244
          %s246 = smul.u32 6, %s23
        $region36: #{model_forward.1} parent=27 // pred_fallthru
          _
      $region28: #{model_forward.1} parent=5 // pred_fallthru
        _
      %p247 = scmp.le.s32.totalorder 1, %s15
      %p248 = scmp.lt.s32.totalorder %s15, 3
      %p249 = pnand %p247, %p248
      %p250 = pneg %p249
      // Predicated region
      $region37: #{model_forward.1} parent=5 // pred_check
        _
      $region38: #{model_forward.1} parent=5 // pred_check_branch
        %252 = sbr.rel (%p249) target = $region40
      $region39: #{model_forward.1} parent=5 // pred_region
        %s253 = ssub.s32 %s15, 1
        // Predicated region
        $region41: #{model_forward.1} parent=39 // pred_check
          %p254 = pneg %p74
        $region42: #{model_forward.1} parent=39 // pred_check_branch
          %256 = sbr.rel (%p254) target = $region44
        $region43: #{model_forward.1} parent=39 // pred_region
          %257 = dma.done [#allocation3], 6144
        $region44: #{model_forward.1} parent=39 // pred_fallthru
          _
        %s258 = sand.u32 %s108, 1
        %s259 = scalar_lea.sflag [#allocation5], %s258
        %s260 = sand.u32 %s108, 1
        %s261 = smul.addr %s260, 384
        %s262 = scalar_lea.vmem [#allocation4], %s261
        // Predicated region
        $region45: #{model_forward.1} parent=39 // pred_check
          %p263 = pneg %p121
        $region46: #{model_forward.1} parent=39 // pred_check_branch
          %265 = sbr.rel (%p263) target = $region48
        $region47: #{model_forward.1} parent=39 // pred_region
          %266 = dma.done %s259, 6144
        $region48: #{model_forward.1} parent=39 // pred_fallthru
          _
        %p267 = scmp.lt.s32.totalorder %s24, 0
        %s268 = scalar_select %p267, %s24, 0
        %s269 = smul.addr %s268, 6
        %s270 = smul.addr %s269, 8
        %s271 = scalar_lea.vmem %s0, %s270
        %p272 = pneg %p53
        %p273 = pneg %p50
        %p274 = pneg %p74
        %p275 = pneg %p71
        %p276 = pneg %p95
        %p277 = pneg %p92
        %s278 = sand.u32 %s108, 1
        %s279 = scalar_lea.sflag [#allocation5], %s278
        %s280 = sand.u32 %s108, 1
        %s281 = smul.addr %s280, 384
        %s282 = scalar_lea.vmem [#allocation4], %s281
        %p283 = pneg %p121
        %p284 = pneg %p118
        %s285 = smul.u32 6, %s25
        %p286 = scmp.lt.s32.totalorder %s285, 11
        %s287 = scalar_select %p286, %s285, 11
        %s288 = scalar_lea.vmem %s4, %s287
        %p289 = pneg %p147
        %p290 = pneg %p144
        %p291 = pneg %p175
        %p292 = pneg %p172
        %s293 = smul.u32 6, %s25
        %p294 = scmp.lt.s32.totalorder %s24, 0
        %s295 = scalar_select %p294, %s24, 0
        %p296 = scmp.lt.s32.totalorder %s293, 11
        %s297 = scalar_select %p296, %s293, 11
        %s298 = smul.addr %s295, 12
        %s299 = sadd.s32 %s297, %s298
        %s300 = smul.addr %s299, 8
        %s301 = scalar_lea.vmem %s5, %s300
        %p302 = scmp.lt.s32.totalorder %s24, 0
        %s303 = scalar_select %p302, %s24, 0
        %s304 = smul.addr %s303, 6
        %s305 = smul.addr %s304, 8
        %s306 = scalar_lea.vmem %s0, %s305
        %s307 = smul.u32 6, %s25
        %s308 = smul.u32 6, %s25
        %p309 = scmp.lt.s32.totalorder %s308, 11
        %s310 = scalar_select %p309, %s308, 11
        %s311 = scalar_lea.vmem %s4, %s310
        %s312 = smul.u32 6, %s25
        %s313 = smul.u32 6, %s25
        %p314 = scmp.lt.s32.totalorder %s24, 0
        %s315 = scalar_select %p314, %s24, 0
        %p316 = scmp.lt.s32.totalorder %s313, 11
        %s317 = scalar_select %p316, %s313, 11
        %s318 = smul.addr %s315, 12
        %s319 = sadd.s32 %s317, %s318
        %s320 = smul.addr %s319, 8
        %s321 = scalar_lea.vmem %s5, %s320
        %s322 = smul.u32 6, %s25
        %v324 = vld [vmem:[%s306] sm:$0xff]
        %v325 = vld [vmem:[%s306 + $0x8] sm:$0xff]
        %v326 = vld [vmem:[%s306 + $0x10] sm:$0xff]
        %v327 = vld [vmem:[%s306 + $0x18] sm:$0xff]
        %v328 = vld [vmem:[%s306 + $0x20] sm:$0xff]
        %v329 = vld [vmem:[%s306 + $0x28] sm:$0xff]
        %v330 = vpack.c.bf16 %v324, %v324
        %v331 = vpack.c.bf16 %v325, %v325
        %v332 = vpack.c.bf16 %v326, %v326
        %v333 = vpack.c.bf16 %v327, %v327
        %v334 = vpack.c.bf16 %v328, %v328
        %v335 = vpack.c.bf16 %v329, %v329
        %v336 = vld [vmem:[#allocation2] sm:$0xf]
        %v337 = vld [vmem:[#allocation2 + $0x4] sm:$0xf]
        %v338 = vld [vmem:[#allocation2 + $0x8] sm:$0xf]
        %v339 = vld [vmem:[#allocation2 + $0xc] sm:$0xf]
        %v340 = vld [vmem:[#allocation2 + $0x10] sm:$0xf]
        %v341 = vld [vmem:[#allocation2 + $0x14] sm:$0xf]
        %v342 = vld [vmem:[#allocation2 + $0x18] sm:$0xf]
        %v343 = vld [vmem:[#allocation2 + $0x1c] sm:$0xf]
        %v344 = vld [vmem:[#allocation2 + $0x20] sm:$0xf]
        %v345 = vld [vmem:[#allocation2 + $0x24] sm:$0xf]
        %v346 = vld [vmem:[#allocation2 + $0x28] sm:$0xf]
        %v347 = vld [vmem:[#allocation2 + $0x2c] sm:$0xf]
        %v348 = vld [vmem:[#allocation2 + $0x30] sm:$0xf]
        %v349 = vld [vmem:[#allocation2 + $0x34] sm:$0xf]
        %v350 = vld [vmem:[#allocation2 + $0x38] sm:$0xf]
        %v351 = vld [vmem:[#allocation2 + $0x3c] sm:$0xf]
        %v352 = vld [vmem:[#allocation2 + $0x40] sm:$0xf]
        %v353 = vld [vmem:[#allocation2 + $0x44] sm:$0xf]
        %v354 = vld [vmem:[#allocation2 + $0x48] sm:$0xf]
        %v355 = vld [vmem:[#allocation2 + $0x4c] sm:$0xf]
        %v356 = vld [vmem:[#allocation2 + $0x50] sm:$0xf]
        %v357 = vld [vmem:[#allocation2 + $0x54] sm:$0xf]
        %v358 = vld [vmem:[#allocation2 + $0x58] sm:$0xf]
        %v359 = vld [vmem:[#allocation2 + $0x5c] sm:$0xf]
        %v360 = vld [vmem:[#allocation2 + $0x60] sm:$0xf]
        %v361 = vld [vmem:[#allocation2 + $0x64] sm:$0xf]
        %v362 = vld [vmem:[#allocation2 + $0x68] sm:$0xf]
        %v363 = vld [vmem:[#allocation2 + $0x6c] sm:$0xf]
        %v364 = vld [vmem:[#allocation2 + $0x70] sm:$0xf]
        %v365 = vld [vmem:[#allocation2 + $0x74] sm:$0xf]
        %v366 = vld [vmem:[#allocation2 + $0x78] sm:$0xf]
        %v367 = vld [vmem:[#allocation2 + $0x7c] sm:$0xf]
        %v368 = vld [vmem:[#allocation2 + $0x80] sm:$0xf]
        %v369 = vld [vmem:[#allocation2 + $0x84] sm:$0xf]
        %v370 = vld [vmem:[#allocation2 + $0x88] sm:$0xf]
        %v371 = vld [vmem:[#allocation2 + $0x8c] sm:$0xf]
        %v372 = vld [vmem:[#allocation2 + $0x90] sm:$0xf]
        %v373 = vld [vmem:[#allocation2 + $0x94] sm:$0xf]
        %v374 = vld [vmem:[#allocation2 + $0x98] sm:$0xf]
        %v375 = vld [vmem:[#allocation2 + $0x9c] sm:$0xf]
        %v376 = vld [vmem:[#allocation2 + $0xa0] sm:$0xf]
        %v377 = vld [vmem:[#allocation2 + $0xa4] sm:$0xf]
        %v378 = vld [vmem:[#allocation2 + $0xa8] sm:$0xf]
        %v379 = vld [vmem:[#allocation2 + $0xac] sm:$0xf]
        %v380 = vld [vmem:[#allocation2 + $0xb0] sm:$0xf]
        %v381 = vld [vmem:[#allocation2 + $0xb4] sm:$0xf]
        %v382 = vld [vmem:[#allocation2 + $0xb8] sm:$0xf]
        %v383 = vld [vmem:[#allocation2 + $0xbc] sm:$0xf]
        %v384 = vld [vmem:[#allocation2 + $0xc0] sm:$0xf]
        %v385 = vld [vmem:[#allocation2 + $0xc4] sm:$0xf]
        %v386 = vld [vmem:[#allocation2 + $0xc8] sm:$0xf]
        %v387 = vld [vmem:[#allocation2 + $0xcc] sm:$0xf]
        %v388 = vld [vmem:[#allocation2 + $0xd0] sm:$0xf]
        %v389 = vld [vmem:[#allocation2 + $0xd4] sm:$0xf]
        %v390 = vld [vmem:[#allocation2 + $0xd8] sm:$0xf]
        %v391 = vld [vmem:[#allocation2 + $0xdc] sm:$0xf]
        %v392 = vld [vmem:[#allocation2 + $0xe0] sm:$0xf]
        %v393 = vld [vmem:[#allocation2 + $0xe4] sm:$0xf]
        %v394 = vld [vmem:[#allocation2 + $0xe8] sm:$0xf]
        %v395 = vld [vmem:[#allocation2 + $0xec] sm:$0xf]
        %v396 = vld [vmem:[#allocation2 + $0xf0] sm:$0xf]
        %v397 = vld [vmem:[#allocation2 + $0xf4] sm:$0xf]
        %v398 = vld [vmem:[#allocation2 + $0xf8] sm:$0xf]
        %v399 = vld [vmem:[#allocation2 + $0xfc] sm:$0xf]
        %v400 = vld [vmem:[#allocation2 + $0x100] sm:$0xf]
        %v401 = vld [vmem:[#allocation2 + $0x104] sm:$0xf]
        %v402 = vld [vmem:[#allocation2 + $0x108] sm:$0xf]
        %v403 = vld [vmem:[#allocation2 + $0x10c] sm:$0xf]
        %v404 = vld [vmem:[#allocation2 + $0x110] sm:$0xf]
        %v405 = vld [vmem:[#allocation2 + $0x114] sm:$0xf]
        %v406 = vld [vmem:[#allocation2 + $0x118] sm:$0xf]
        %v407 = vld [vmem:[#allocation2 + $0x11c] sm:$0xf]
        %v408 = vld [vmem:[#allocation2 + $0x120] sm:$0xf]
        %v409 = vld [vmem:[#allocation2 + $0x124] sm:$0xf]
        %v410 = vld [vmem:[#allocation2 + $0x128] sm:$0xf]
        %v411 = vld [vmem:[#allocation2 + $0x12c] sm:$0xf]
        %v412 = vld [vmem:[#allocation2 + $0x130] sm:$0xf]
        %v413 = vld [vmem:[#allocation2 + $0x134] sm:$0xf]
        %v414 = vld [vmem:[#allocation2 + $0x138] sm:$0xf]
        %v415 = vld [vmem:[#allocation2 + $0x13c] sm:$0xf]
        %v416 = vld [vmem:[#allocation2 + $0x140] sm:$0xf]
        %v417 = vld [vmem:[#allocation2 + $0x144] sm:$0xf]
        %v418 = vld [vmem:[#allocation2 + $0x148] sm:$0xf]
        %v419 = vld [vmem:[#allocation2 + $0x14c] sm:$0xf]
        %v420 = vld [vmem:[#allocation2 + $0x150] sm:$0xf]
        %v421 = vld [vmem:[#allocation2 + $0x154] sm:$0xf]
        %v422 = vld [vmem:[#allocation2 + $0x158] sm:$0xf]
        %v423 = vld [vmem:[#allocation2 + $0x15c] sm:$0xf]
        %v424 = vld [vmem:[#allocation2 + $0x160] sm:$0xf]
        %v425 = vld [vmem:[#allocation2 + $0x164] sm:$0xf]
        %v426 = vld [vmem:[#allocation2 + $0x168] sm:$0xf]
        %v427 = vld [vmem:[#allocation2 + $0x16c] sm:$0xf]
        %v428 = vld [vmem:[#allocation2 + $0x170] sm:$0xf]
        %v429 = vld [vmem:[#allocation2 + $0x174] sm:$0xf]
        %v430 = vld [vmem:[#allocation2 + $0x178] sm:$0xf]
        %v431 = vld [vmem:[#allocation2 + $0x17c] sm:$0xf]
        %v432 = vld [vmem:[%s2] sm:$0x1]
        %v434 = vlaneseq
        %v435 = vshrl.u32 %v434, 7
        %v436 = vsub.s32 0, %v435
        %v437 = vrot.slane %v432, %v436
        %v535 = vunpack.c.l.b16 %v336
        %v536 = vunpack.c.l.b16 %v337
        %v537 = vunpack.c.l.b16 %v338
        %v538 = vunpack.c.l.b16 %v339
        %v539 = vunpack.c.l.b16 %v340
        %v540 = vunpack.c.l.b16 %v341
        %v541 = vunpack.c.l.b16 %v342
        %v542 = vunpack.c.l.b16 %v343
        %v543 = vunpack.c.l.b16 %v344
        %v544 = vunpack.c.l.b16 %v345
        %v545 = vunpack.c.l.b16 %v346
        %v546 = vunpack.c.l.b16 %v347
        %v547 = vunpack.c.l.b16 %v348
        %v548 = vunpack.c.l.b16 %v349
        %v549 = vunpack.c.l.b16 %v350
        %v550 = vunpack.c.l.b16 %v351
        %v551 = vunpack.c.l.b16 %v352
        %v552 = vunpack.c.l.b16 %v353
        %v553 = vunpack.c.l.b16 %v354
        %v554 = vunpack.c.l.b16 %v355
        %v555 = vunpack.c.l.b16 %v356
        %v556 = vunpack.c.l.b16 %v357
        %v557 = vunpack.c.l.b16 %v358
        %v558 = vunpack.c.l.b16 %v359
        %v559 = vunpack.c.l.b16 %v360
        %v560 = vunpack.c.l.b16 %v361
        %v561 = vunpack.c.l.b16 %v362
        %v562 = vunpack.c.l.b16 %v363
        %v563 = vunpack.c.l.b16 %v364
        %v564 = vunpack.c.l.b16 %v365
        %v565 = vunpack.c.l.b16 %v366
        %v566 = vunpack.c.l.b16 %v367
        %v567 = vunpack.c.l.b16 %v368
        %v568 = vunpack.c.l.b16 %v369
        %v569 = vunpack.c.l.b16 %v370
        %v570 = vunpack.c.l.b16 %v371
        %v571 = vunpack.c.l.b16 %v372
        %v572 = vunpack.c.l.b16 %v373
        %v573 = vunpack.c.l.b16 %v374
        %v574 = vunpack.c.l.b16 %v375
        %v575 = vunpack.c.l.b16 %v376
        %v576 = vunpack.c.l.b16 %v377
        %v577 = vunpack.c.l.b16 %v378
        %v578 = vunpack.c.l.b16 %v379
        %v579 = vunpack.c.l.b16 %v380
        %v580 = vunpack.c.l.b16 %v381
        %v581 = vunpack.c.l.b16 %v382
        %v582 = vunpack.c.l.b16 %v383
        %v583 = vunpack.c.l.b16 %v384
        %v584 = vunpack.c.l.b16 %v385
        %v585 = vunpack.c.l.b16 %v386
        %v586 = vunpack.c.l.b16 %v387
        %v587 = vunpack.c.l.b16 %v388
        %v588 = vunpack.c.l.b16 %v389
        %v589 = vunpack.c.l.b16 %v390
        %v590 = vunpack.c.l.b16 %v391
        %v591 = vunpack.c.l.b16 %v392
        %v592 = vunpack.c.l.b16 %v393
        %v593 = vunpack.c.l.b16 %v394
        %v594 = vunpack.c.l.b16 %v395
        %v595 = vunpack.c.l.b16 %v396
        %v596 = vunpack.c.l.b16 %v397
        %v597 = vunpack.c.l.b16 %v398
        %v598 = vunpack.c.l.b16 %v399
        %v599 = vunpack.c.l.b16 %v400
        %v600 = vunpack.c.l.b16 %v401
        %v601 = vunpack.c.l.b16 %v402
        %v602 = vunpack.c.l.b16 %v403
        %v603 = vunpack.c.l.b16 %v404
        %v604 = vunpack.c.l.b16 %v405
        %v605 = vunpack.c.l.b16 %v406
        %v606 = vunpack.c.l.b16 %v407
        %v607 = vunpack.c.l.b16 %v408
        %v608 = vunpack.c.l.b16 %v409
        %v609 = vunpack.c.l.b16 %v410
        %v610 = vunpack.c.l.b16 %v411
        %v611 = vunpack.c.l.b16 %v412
        %v612 = vunpack.c.l.b16 %v413
        %v613 = vunpack.c.l.b16 %v414
        %v614 = vunpack.c.l.b16 %v415
        %v615 = vunpack.c.l.b16 %v416
        %v616 = vunpack.c.l.b16 %v417
        %v617 = vunpack.c.l.b16 %v418
        %v618 = vunpack.c.l.b16 %v419
        %v619 = vunpack.c.l.b16 %v420
        %v620 = vunpack.c.l.b16 %v421
        %v621 = vunpack.c.l.b16 %v422
        %v622 = vunpack.c.l.b16 %v423
        %v623 = vunpack.c.l.b16 %v424
        %v624 = vunpack.c.l.b16 %v425
        %v625 = vunpack.c.l.b16 %v426
        %v626 = vunpack.c.l.b16 %v427
        %v627 = vunpack.c.l.b16 %v428
        %v628 = vunpack.c.l.b16 %v429
        %v629 = vunpack.c.l.b16 %v430
        %v630 = vunpack.c.l.b16 %v431
        %v631 = vpack.c.b16 %v536, %v535
        %v632 = vpack.c.b16 %v538, %v537
        %v633 = vpack.c.b16 %v540, %v539
        %v634 = vpack.c.b16 %v542, %v541
        %v635 = vpack.c.b16 %v544, %v543
        %v636 = vpack.c.b16 %v546, %v545
        %v637 = vpack.c.b16 %v548, %v547
        %v638 = vpack.c.b16 %v550, %v549
        %v639 = vpack.c.b16 %v552, %v551
        %v640 = vpack.c.b16 %v554, %v553
        %v641 = vpack.c.b16 %v556, %v555
        %v642 = vpack.c.b16 %v558, %v557
        %v643 = vpack.c.b16 %v560, %v559
        %v644 = vpack.c.b16 %v562, %v561
        %v645 = vpack.c.b16 %v564, %v563
        %v646 = vpack.c.b16 %v566, %v565
        %v647 = vpack.c.b16 %v568, %v567
        %v648 = vpack.c.b16 %v570, %v569
        %v649 = vpack.c.b16 %v572, %v571
        %v650 = vpack.c.b16 %v574, %v573
        %v651 = vpack.c.b16 %v576, %v575
        %v652 = vpack.c.b16 %v578, %v577
        %v653 = vpack.c.b16 %v580, %v579
        %v654 = vpack.c.b16 %v582, %v581
        %v655 = vpack.c.b16 %v584, %v583
        %v656 = vpack.c.b16 %v586, %v585
        %v657 = vpack.c.b16 %v588, %v587
        %v658 = vpack.c.b16 %v590, %v589
        %v659 = vpack.c.b16 %v592, %v591
        %v660 = vpack.c.b16 %v594, %v593
        %v661 = vpack.c.b16 %v596, %v595
        %v662 = vpack.c.b16 %v598, %v597
        %v663 = vpack.c.b16 %v600, %v599
        %v664 = vpack.c.b16 %v602, %v601
        %v665 = vpack.c.b16 %v604, %v603
        %v666 = vpack.c.b16 %v606, %v605
        %v667 = vpack.c.b16 %v608, %v607
        %v668 = vpack.c.b16 %v610, %v609
        %v669 = vpack.c.b16 %v612, %v611
        %v670 = vpack.c.b16 %v614, %v613
        %v671 = vpack.c.b16 %v616, %v615
        %v672 = vpack.c.b16 %v618, %v617
        %v673 = vpack.c.b16 %v620, %v619
        %v674 = vpack.c.b16 %v622, %v621
        %v675 = vpack.c.b16 %v624, %v623
        %v676 = vpack.c.b16 %v626, %v625
        %v677 = vpack.c.b16 %v628, %v627
        %v678 = vpack.c.b16 %v630, %v629
        %727 = vmatprep.subr.bf16.mxu0 0
        %728 = vmatpush1.bf16.msra.mxu0 %v631
        %729 = vmatprep.subr.bf16.mxu0 0
        %730 = vmatpush1.bf16.msra.mxu0 %v632
        %731 = vmatprep.subr.bf16.mxu0 0
        %732 = vmatpush1.bf16.msra.mxu0 %v633
        %733 = vmatprep.subr.bf16.mxu0 0
        %734 = vmatpush1.bf16.msra.mxu0 %v634
        %735 = vmatprep.subr.bf16.mxu0 0
        %736 = vmatpush1.bf16.msra.mxu0 %v635
        %737 = vmatprep.subr.bf16.mxu0 0
        %738 = vmatpush1.bf16.msra.mxu0 %v636
        %739 = vmatprep.subr.bf16.mxu0 0
        %740 = vmatpush1.bf16.msra.mxu0 %v637
        %741 = vmatprep.subr.bf16.mxu0 0
        %742 = vmatpush1.bf16.msra.mxu0 %v638
        %743 = vmatprep.subr.bf16.mxu0 0
        %744 = vmatpush1.bf16.msra.mxu0 %v639
        %745 = vmatprep.subr.bf16.mxu0 0
        %746 = vmatpush1.bf16.msra.mxu0 %v640
        %747 = vmatprep.subr.bf16.mxu0 0
        %748 = vmatpush1.bf16.msra.mxu0 %v641
        %749 = vmatprep.subr.bf16.mxu0 0
        %750 = vmatpush1.bf16.msra.mxu0 %v642
        %751 = vmatprep.subr.bf16.mxu0 0
        %752 = vmatpush1.bf16.msra.mxu0 %v643
        %753 = vmatprep.subr.bf16.mxu0 0
        %754 = vmatpush1.bf16.msra.mxu0 %v644
        %755 = vmatprep.subr.bf16.mxu0 0
        %756 = vmatpush1.bf16.msra.mxu0 %v645
        %757 = vmatprep.subr.bf16.mxu0 0
        %758 = vmatpush1.bf16.msra.mxu0 %v646
        %759 = vmatprep.mubr.bf16.mxu0 %v331
        %760 = vmatmul.mubr.bf16.gmra.mrb[0].mxu0 %v330
        %v761 = vpop.f32.mrb[0].mxu0
        %v762 = vadd.f32 %v437, %v761
        %v763 = vpop.f32.mrb[0].mxu0
        %v764 = vpop.f32.mrb[0].mxu0
        %v765 = vpop.f32.mrb[0].mxu0
        %766 = vdwg.mxu0
        %767 = vmatprep.subr.bf16.mxu0 0
        %768 = vmatpush1.bf16.msra.mxu0 %v647
        %769 = vmatprep.subr.bf16.mxu0 0
        %770 = vmatpush1.bf16.msra.mxu0 %v648
        %771 = vmatprep.subr.bf16.mxu0 0
        %772 = vmatpush1.bf16.msra.mxu0 %v649
        %773 = vmatprep.subr.bf16.mxu0 0
        %774 = vmatpush1.bf16.msra.mxu0 %v650
        %775 = vmatprep.subr.bf16.mxu0 0
        %776 = vmatpush1.bf16.msra.mxu0 %v651
        %777 = vmatprep.subr.bf16.mxu0 0
        %778 = vmatpush1.bf16.msra.mxu0 %v652
        %779 = vmatprep.subr.bf16.mxu0 0
        %780 = vmatpush1.bf16.msra.mxu0 %v653
        %781 = vmatprep.subr.bf16.mxu0 0
        %782 = vmatpush1.bf16.msra.mxu0 %v654
        %783 = vmatprep.subr.bf16.mxu0 0
        %784 = vmatpush1.bf16.msra.mxu0 %v655
        %785 = vmatprep.subr.bf16.mxu0 0
        %786 = vmatpush1.bf16.msra.mxu0 %v656
        %787 = vmatprep.subr.bf16.mxu0 0
        %788 = vmatpush1.bf16.msra.mxu0 %v657
        %789 = vmatprep.subr.bf16.mxu0 0
        %790 = vmatpush1.bf16.msra.mxu0 %v658
        %791 = vmatprep.subr.bf16.mxu0 0
        %792 = vmatpush1.bf16.msra.mxu0 %v659
        %793 = vmatprep.subr.bf16.mxu0 0
        %794 = vmatpush1.bf16.msra.mxu0 %v660
        %795 = vmatprep.subr.bf16.mxu0 0
        %796 = vmatpush1.bf16.msra.mxu0 %v661
        %797 = vmatprep.subr.bf16.mxu0 0
        %798 = vmatpush1.bf16.msra.mxu0 %v662
        %799 = vmatprep.mubr.bf16.mxu0 %v333
        %800 = vmatmul.mubr.bf16.gmra.mrb[0].mxu0 %v332
        %v801 = vpop.f32.mrb[0].mxu0
        %v802 = vadd.f32 %v762, %v801
        %v803 = vpop.f32.mrb[0].mxu0
        %v804 = vpop.f32.mrb[0].mxu0
        %v805 = vpop.f32.mrb[0].mxu0
        %806 = vdwg.mxu0
        %807 = vmatprep.subr.bf16.mxu0 0
        %808 = vmatpush1.bf16.msra.mxu0 %v663
        %809 = vmatprep.subr.bf16.mxu0 0
        %810 = vmatpush1.bf16.msra.mxu0 %v664
        %811 = vmatprep.subr.bf16.mxu0 0
        %812 = vmatpush1.bf16.msra.mxu0 %v665
        %813 = vmatprep.subr.bf16.mxu0 0
        %814 = vmatpush1.bf16.msra.mxu0 %v666
        %815 = vmatprep.subr.bf16.mxu0 0
        %816 = vmatpush1.bf16.msra.mxu0 %v667
        %817 = vmatprep.subr.bf16.mxu0 0
        %818 = vmatpush1.bf16.msra.mxu0 %v668
        %819 = vmatprep.subr.bf16.mxu0 0
        %820 = vmatpush1.bf16.msra.mxu0 %v669
        %821 = vmatprep.subr.bf16.mxu0 0
        %822 = vmatpush1.bf16.msra.mxu0 %v670
        %823 = vmatprep.subr.bf16.mxu0 0
        %824 = vmatpush1.bf16.msra.mxu0 %v671
        %825 = vmatprep.subr.bf16.mxu0 0
        %826 = vmatpush1.bf16.msra.mxu0 %v672
        %827 = vmatprep.subr.bf16.mxu0 0
        %828 = vmatpush1.bf16.msra.mxu0 %v673
        %829 = vmatprep.subr.bf16.mxu0 0
        %830 = vmatpush1.bf16.msra.mxu0 %v674
        %831 = vmatprep.subr.bf16.mxu0 0
        %832 = vmatpush1.bf16.msra.mxu0 %v675
        %833 = vmatprep.subr.bf16.mxu0 0
        %834 = vmatpush1.bf16.msra.mxu0 %v676
        %835 = vmatprep.subr.bf16.mxu0 0
        %836 = vmatpush1.bf16.msra.mxu0 %v677
        %837 = vmatprep.subr.bf16.mxu0 0
        %838 = vmatpush1.bf16.msra.mxu0 %v678
        %839 = vmatprep.mubr.bf16.mxu0 %v335
        %840 = vmatmul.mubr.bf16.gmra.mrb[0].mxu0 %v334
        %v841 = vpop.f32.mrb[0].mxu0
        %v842 = vadd.f32 %v802, %v841
        %v843 = vpop.f32.mrb[0].mxu0
        %v844 = vpop.f32.mrb[0].mxu0
        %v845 = vpop.f32.mrb[0].mxu0
        %846 = vdwg.mxu0
        %v847 = vtanh.pop %v842
        %v848 = vpack.c.bf16 %v847, %v847
        %v849 = vld [vmem:[%s262] sm:$0xff]
        %v850 = vld [vmem:[%s262 + $0x8] sm:$0xff]
        %v851 = vld [vmem:[%s262 + $0x10] sm:$0xff]
        %v852 = vld [vmem:[%s262 + $0x18] sm:$0xff]
        %v853 = vld [vmem:[%s262 + $0x20] sm:$0xff]
        %v854 = vld [vmem:[%s262 + $0x28] sm:$0xff]
        %v855 = vld [vmem:[%s262 + $0x30] sm:$0xff]
        %v856 = vld [vmem:[%s262 + $0x38] sm:$0xff]
        %v857 = vld [vmem:[%s262 + $0x40] sm:$0xff]
        %v858 = vld [vmem:[%s262 + $0x48] sm:$0xff]
        %v859 = vld [vmem:[%s262 + $0x50] sm:$0xff]
        %v860 = vld [vmem:[%s262 + $0x58] sm:$0xff]
        %v861 = vld [vmem:[%s262 + $0x60] sm:$0xff]
        %v862 = vld [vmem:[%s262 + $0x68] sm:$0xff]
        %v863 = vld [vmem:[%s262 + $0x70] sm:$0xff]
        %v864 = vld [vmem:[%s262 + $0x78] sm:$0xff]
        %v865 = vld [vmem:[%s262 + $0x80] sm:$0xff]
        %v866 = vld [vmem:[%s262 + $0x88] sm:$0xff]
        %v867 = vld [vmem:[%s262 + $0x90] sm:$0xff]
        %v868 = vld [vmem:[%s262 + $0x98] sm:$0xff]
        %v869 = vld [vmem:[%s262 + $0xa0] sm:$0xff]
        %v870 = vld [vmem:[%s262 + $0xa8] sm:$0xff]
        %v871 = vld [vmem:[%s262 + $0xb0] sm:$0xff]
        %v872 = vld [vmem:[%s262 + $0xb8] sm:$0xff]
        %v873 = vld [vmem:[%s262 + $0xc0] sm:$0xff]
        %v874 = vld [vmem:[%s262 + $0xc8] sm:$0xff]
        %v875 = vld [vmem:[%s262 + $0xd0] sm:$0xff]
        %v876 = vld [vmem:[%s262 + $0xd8] sm:$0xff]
        %v877 = vld [vmem:[%s262 + $0xe0] sm:$0xff]
        %v878 = vld [vmem:[%s262 + $0xe8] sm:$0xff]
        %v879 = vld [vmem:[%s262 + $0xf0] sm:$0xff]
        %v880 = vld [vmem:[%s262 + $0xf8] sm:$0xff]
        %v881 = vld [vmem:[%s262 + $0x100] sm:$0xff]
        %v882 = vld [vmem:[%s262 + $0x108] sm:$0xff]
        %v883 = vld [vmem:[%s262 + $0x110] sm:$0xff]
        %v884 = vld [vmem:[%s262 + $0x118] sm:$0xff]
        %v885 = vld [vmem:[%s262 + $0x120] sm:$0xff]
        %v886 = vld [vmem:[%s262 + $0x128] sm:$0xff]
        %v887 = vld [vmem:[%s262 + $0x130] sm:$0xff]
        %v888 = vld [vmem:[%s262 + $0x138] sm:$0xff]
        %v889 = vld [vmem:[%s262 + $0x140] sm:$0xff]
        %v890 = vld [vmem:[%s262 + $0x148] sm:$0xff]
        %v891 = vld [vmem:[%s262 + $0x150] sm:$0xff]
        %v892 = vld [vmem:[%s262 + $0x158] sm:$0xff]
        %v893 = vld [vmem:[%s262 + $0x160] sm:$0xff]
        %v894 = vld [vmem:[%s262 + $0x168] sm:$0xff]
        %v895 = vld [vmem:[%s262 + $0x170] sm:$0xff]
        %v896 = vld [vmem:[%s262 + $0x178] sm:$0xff]
        %v897 = vld [vmem:[%s311] sm:$0x3f]
        %v899 = vlaneseq
        %v900 = vshrl.u32 %v899, 7
        %v901 = vsub.s32 0, %v900
        %v902 = vrot.slane %v897, %v901
        %v903 = vlaneseq
        %v904 = vshrl.u32 %v903, 7
        %v905 = vsub.s32 1, %v904
        %v906 = vrot.slane %v897, %v905
        %v907 = vlaneseq
        %v908 = vshrl.u32 %v907, 7
        %v909 = vsub.s32 2, %v908
        %v910 = vrot.slane %v897, %v909
        %v911 = vlaneseq
        %v912 = vshrl.u32 %v911, 7
        %v913 = vsub.s32 3, %v912
        %v914 = vrot.slane %v897, %v913
        %v915 = vlaneseq
        %v916 = vshrl.u32 %v915, 7
        %v917 = vsub.s32 4, %v916
        %v918 = vrot.slane %v897, %v917
        %v919 = vlaneseq
        %v920 = vshrl.u32 %v919, 7
        %v921 = vsub.s32 5, %v920
        %v922 = vrot.slane %v897, %v921
        %v977 = vunpack.c.l.b16 %v849
        %v978 = vunpack.c.h.b16 %v849
        %v979 = vunpack.c.l.b16 %v850
        %v980 = vunpack.c.h.b16 %v850
        %v981 = vunpack.c.l.b16 %v851
        %v982 = vunpack.c.h.b16 %v851
        %v983 = vunpack.c.l.b16 %v852
        %v984 = vunpack.c.h.b16 %v852
        %v985 = vunpack.c.l.b16 %v853
        %v986 = vunpack.c.h.b16 %v853
        %v987 = vunpack.c.l.b16 %v854
        %v988 = vunpack.c.h.b16 %v854
        %v989 = vunpack.c.l.b16 %v855
        %v990 = vunpack.c.h.b16 %v855
        %v991 = vunpack.c.l.b16 %v856
        %v992 = vunpack.c.h.b16 %v856
        %v993 = vunpack.c.l.b16 %v857
        %v994 = vunpack.c.h.b16 %v857
        %v995 = vunpack.c.l.b16 %v858
        %v996 = vunpack.c.h.b16 %v858
        %v997 = vunpack.c.l.b16 %v859
        %v998 = vunpack.c.h.b16 %v859
        %v999 = vunpack.c.l.b16 %v860
        %v1000 = vunpack.c.h.b16 %v860
        %v1001 = vunpack.c.l.b16 %v861
        %v1002 = vunpack.c.h.b16 %v861
        %v1003 = vunpack.c.l.b16 %v862
        %v1004 = vunpack.c.h.b16 %v862
        %v1005 = vunpack.c.l.b16 %v863
        %v1006 = vunpack.c.h.b16 %v863
        %v1007 = vunpack.c.l.b16 %v864
        %v1008 = vunpack.c.h.b16 %v864
        %v1009 = vunpack.c.l.b16 %v865
        %v1010 = vunpack.c.h.b16 %v865
        %v1011 = vunpack.c.l.b16 %v866
        %v1012 = vunpack.c.h.b16 %v866
        %v1013 = vunpack.c.l.b16 %v867
        %v1014 = vunpack.c.h.b16 %v867
        %v1015 = vunpack.c.l.b16 %v868
        %v1016 = vunpack.c.h.b16 %v868
        %v1017 = vunpack.c.l.b16 %v869
        %v1018 = vunpack.c.h.b16 %v869
        %v1019 = vunpack.c.l.b16 %v870
        %v1020 = vunpack.c.h.b16 %v870
        %v1021 = vunpack.c.l.b16 %v871
        %v1022 = vunpack.c.h.b16 %v871
        %v1023 = vunpack.c.l.b16 %v872
        %v1024 = vunpack.c.h.b16 %v872
        %v1025 = vunpack.c.l.b16 %v873
        %v1026 = vunpack.c.h.b16 %v873
        %v1027 = vunpack.c.l.b16 %v874
        %v1028 = vunpack.c.h.b16 %v874
        %v1029 = vunpack.c.l.b16 %v875
        %v1030 = vunpack.c.h.b16 %v875
        %v1031 = vunpack.c.l.b16 %v876
        %v1032 = vunpack.c.h.b16 %v876
        %v1033 = vunpack.c.l.b16 %v877
        %v1034 = vunpack.c.h.b16 %v877
        %v1035 = vunpack.c.l.b16 %v878
        %v1036 = vunpack.c.h.b16 %v878
        %v1037 = vunpack.c.l.b16 %v879
        %v1038 = vunpack.c.h.b16 %v879
        %v1039 = vunpack.c.l.b16 %v880
        %v1040 = vunpack.c.h.b16 %v880
        %v1041 = vunpack.c.l.b16 %v881
        %v1042 = vunpack.c.h.b16 %v881
        %v1043 = vunpack.c.l.b16 %v882
        %v1044 = vunpack.c.h.b16 %v882
        %v1045 = vunpack.c.l.b16 %v883
        %v1046 = vunpack.c.h.b16 %v883
        %v1047 = vunpack.c.l.b16 %v884
        %v1048 = vunpack.c.h.b16 %v884
        %v1049 = vunpack.c.l.b16 %v885
        %v1050 = vunpack.c.h.b16 %v885
        %v1051 = vunpack.c.l.b16 %v886
        %v1052 = vunpack.c.h.b16 %v886
        %v1053 = vunpack.c.l.b16 %v887
        %v1054 = vunpack.c.h.b16 %v887
        %v1055 = vunpack.c.l.b16 %v888
        %v1056 = vunpack.c.h.b16 %v888
        %v1057 = vunpack.c.l.b16 %v889
        %v1058 = vunpack.c.h.b16 %v889
        %v1059 = vunpack.c.l.b16 %v890
        %v1060 = vunpack.c.h.b16 %v890
        %v1061 = vunpack.c.l.b16 %v891
        %v1062 = vunpack.c.h.b16 %v891
        %v1063 = vunpack.c.l.b16 %v892
        %v1064 = vunpack.c.h.b16 %v892
        %v1065 = vunpack.c.l.b16 %v893
        %v1066 = vunpack.c.h.b16 %v893
        %v1067 = vunpack.c.l.b16 %v894
        %v1068 = vunpack.c.h.b16 %v894
        %v1069 = vunpack.c.l.b16 %v895
        %v1070 = vunpack.c.h.b16 %v895
        %v1071 = vunpack.c.l.b16 %v896
        %v1072 = vunpack.c.h.b16 %v896
        %v1073 = vpack.c.b16 %v983, %v977
        %v1074 = vpack.c.b16 %v984, %v978
        %v1075 = vpack.c.b16 %v985, %v979
        %v1076 = vpack.c.b16 %v986, %v980
        %v1077 = vpack.c.b16 %v987, %v981
        %v1078 = vpack.c.b16 %v988, %v982
        %v1079 = vpack.c.b16 %v995, %v989
        %v1080 = vpack.c.b16 %v996, %v990
        %v1081 = vpack.c.b16 %v997, %v991
        %v1082 = vpack.c.b16 %v998, %v992
        %v1083 = vpack.c.b16 %v999, %v993
        %v1084 = vpack.c.b16 %v1000, %v994
        %v1085 = vpack.c.b16 %v1007, %v1001
        %v1086 = vpack.c.b16 %v1008, %v1002
        %v1087 = vpack.c.b16 %v1009, %v1003
        %v1088 = vpack.c.b16 %v1010, %v1004
        %v1089 = vpack.c.b16 %v1011, %v1005
        %v1090 = vpack.c.b16 %v1012, %v1006
        %v1091 = vpack.c.b16 %v1019, %v1013
        %v1092 = vpack.c.b16 %v1020, %v1014
        %v1093 = vpack.c.b16 %v1021, %v1015
        %v1094 = vpack.c.b16 %v1022, %v1016
        %v1095 = vpack.c.b16 %v1023, %v1017
        %v1096 = vpack.c.b16 %v1024, %v1018
        %v1097 = vpack.c.b16 %v1031, %v1025
        %v1098 = vpack.c.b16 %v1032, %v1026
        %v1099 = vpack.c.b16 %v1033, %v1027
        %v1100 = vpack.c.b16 %v1034, %v1028
        %v1101 = vpack.c.b16 %v1035, %v1029
        %v1102 = vpack.c.b16 %v1036, %v1030
        %v1103 = vpack.c.b16 %v1043, %v1037
        %v1104 = vpack.c.b16 %v1044, %v1038
        %v1105 = vpack.c.b16 %v1045, %v1039
        %v1106 = vpack.c.b16 %v1046, %v1040
        %v1107 = vpack.c.b16 %v1047, %v1041
        %v1108 = vpack.c.b16 %v1048, %v1042
        %v1109 = vpack.c.b16 %v1055, %v1049
        %v1110 = vpack.c.b16 %v1056, %v1050
        %v1111 = vpack.c.b16 %v1057, %v1051
        %v1112 = vpack.c.b16 %v1058, %v1052
        %v1113 = vpack.c.b16 %v1059, %v1053
        %v1114 = vpack.c.b16 %v1060, %v1054
        %v1115 = vpack.c.b16 %v1067, %v1061
        %v1116 = vpack.c.b16 %v1068, %v1062
        %v1117 = vpack.c.b16 %v1069, %v1063
        %v1118 = vpack.c.b16 %v1070, %v1064
        %v1119 = vpack.c.b16 %v1071, %v1065
        %v1120 = vpack.c.b16 %v1072, %v1066
        %1169 = vmatprep.subr.bf16.mxu0 %v1074
        %1170 = vmatpush1.bf16.msra.mxu0 %v1073
        %1171 = vmatprep.subr.bf16.mxu0 %v1080
        %1172 = vmatpush1.bf16.msra.mxu0 %v1079
        %1173 = vmatprep.subr.bf16.mxu0 %v1086
        %1174 = vmatpush1.bf16.msra.mxu0 %v1085
        %1175 = vmatprep.subr.bf16.mxu0 %v1092
        %1176 = vmatpush1.bf16.msra.mxu0 %v1091
        %1177 = vmatprep.subr.bf16.mxu0 %v1098
        %1178 = vmatpush1.bf16.msra.mxu0 %v1097
        %1179 = vmatprep.subr.bf16.mxu0 %v1104
        %1180 = vmatpush1.bf16.msra.mxu0 %v1103
        %1181 = vmatprep.subr.bf16.mxu0 %v1110
        %1182 = vmatpush1.bf16.msra.mxu0 %v1109
        %1183 = vmatprep.subr.bf16.mxu0 %v1116
        %1184 = vmatpush1.bf16.msra.mxu0 %v1115
        %1185 = vmatprep.subr.bf16.mxu0 0
        %1186 = vmatpush1.bf16.msra.mxu0 0
        %1187 = vmatprep.subr.bf16.mxu0 0
        %1188 = vmatpush1.bf16.msra.mxu0 0
        %1189 = vmatprep.subr.bf16.mxu0 0
        %1190 = vmatpush1.bf16.msra.mxu0 0
        %1191 = vmatprep.subr.bf16.mxu0 0
        %1192 = vmatpush1.bf16.msra.mxu0 0
        %1193 = vmatprep.subr.bf16.mxu0 0
        %1194 = vmatpush1.bf16.msra.mxu0 0
        %1195 = vmatprep.subr.bf16.mxu0 0
        %1196 = vmatpush1.bf16.msra.mxu0 0
        %1197 = vmatprep.subr.bf16.mxu0 0
        %1198 = vmatpush1.bf16.msra.mxu0 0
        %1199 = vmatprep.subr.bf16.mxu0 0
        %1200 = vmatpush1.bf16.msra.mxu0 0
        %1201 = vmatprep.mubr.bf16.mxu0 0
        %1202 = vmatmul.mubr.bf16.gmra.mrb[0].mxu0 %v848
        %v1203 = vpop.f32.mrb[0].mxu0
        %v1204 = vadd.f32 %v902, %v1203
        %v1205 = vpop.f32.mrb[0].mxu0
        %v1206 = vadd.f32 %v906, %v1205
        %v1207 = vpop.f32.mrb[0].mxu0
        %v1208 = vpop.f32.mrb[0].mxu0
        %1209 = vdwg.mxu0
        %1210 = vmatprep.subr.bf16.mxu0 %v1076
        %1211 = vmatpush1.bf16.msra.mxu0 %v1075
        %1212 = vmatprep.subr.bf16.mxu0 %v1082
        %1213 = vmatpush1.bf16.msra.mxu0 %v1081
        %1214 = vmatprep.subr.bf16.mxu0 %v1088
        %1215 = vmatpush1.bf16.msra.mxu0 %v1087
        %1216 = vmatprep.subr.bf16.mxu0 %v1094
        %1217 = vmatpush1.bf16.msra.mxu0 %v1093
        %1218 = vmatprep.subr.bf16.mxu0 %v1100
        %1219 = vmatpush1.bf16.msra.mxu0 %v1099
        %1220 = vmatprep.subr.bf16.mxu0 %v1106
        %1221 = vmatpush1.bf16.msra.mxu0 %v1105
        %1222 = vmatprep.subr.bf16.mxu0 %v1112
        %1223 = vmatpush1.bf16.msra.mxu0 %v1111
        %1224 = vmatprep.subr.bf16.mxu0 %v1118
        %1225 = vmatpush1.bf16.msra.mxu0 %v1117
        %1226 = vmatprep.subr.bf16.mxu0 0
        %1227 = vmatpush1.bf16.msra.mxu0 0
        %1228 = vmatprep.subr.bf16.mxu0 0
        %1229 = vmatpush1.bf16.msra.mxu0 0
        %1230 = vmatprep.subr.bf16.mxu0 0
        %1231 = vmatpush1.bf16.msra.mxu0 0
        %1232 = vmatprep.subr.bf16.mxu0 0
        %1233 = vmatpush1.bf16.msra.mxu0 0
        %1234 = vmatprep.subr.bf16.mxu0 0
        %1235 = vmatpush1.bf16.msra.mxu0 0
        %1236 = vmatprep.subr.bf16.mxu0 0
        %1237 = vmatpush1.bf16.msra.mxu0 0
        %1238 = vmatprep.subr.bf16.mxu0 0
        %1239 = vmatpush1.bf16.msra.mxu0 0
        %1240 = vmatprep.subr.bf16.mxu0 0
        %1241 = vmatpush1.bf16.msra.mxu0 0
        %1242 = vmatprep.mubr.bf16.mxu0 0
        %1243 = vmatmul.mubr.bf16.gmra.mrb[0].mxu0 %v848
        %v1244 = vpop.f32.mrb[0].mxu0
        %v1245 = vadd.f32 %v910, %v1244
        %v1246 = vpop.f32.mrb[0].mxu0
        %v1247 = vadd.f32 %v914, %v1246
        %v1248 = vpop.f32.mrb[0].mxu0
        %v1249 = vpop.f32.mrb[0].mxu0
        %1250 = vdwg.mxu0
        %1251 = vmatprep.subr.bf16.mxu0 %v1078
        %1252 = vmatpush1.bf16.msra.mxu0 %v1077
        %1253 = vmatprep.subr.bf16.mxu0 %v1084
        %1254 = vmatpush1.bf16.msra.mxu0 %v1083
        %1255 = vmatprep.subr.bf16.mxu0 %v1090
        %1256 = vmatpush1.bf16.msra.mxu0 %v1089
        %1257 = vmatprep.subr.bf16.mxu0 %v1096
        %1258 = vmatpush1.bf16.msra.mxu0 %v1095
        %1259 = vmatprep.subr.bf16.mxu0 %v1102
        %1260 = vmatpush1.bf16.msra.mxu0 %v1101
        %1261 = vmatprep.subr.bf16.mxu0 %v1108
        %1262 = vmatpush1.bf16.msra.mxu0 %v1107
        %1263 = vmatprep.subr.bf16.mxu0 %v1114
        %1264 = vmatpush1.bf16.msra.mxu0 %v1113
        %1265 = vmatprep.subr.bf16.mxu0 %v1120
        %1266 = vmatpush1.bf16.msra.mxu0 %v1119
        %1267 = vmatprep.subr.bf16.mxu0 0
        %1268 = vmatpush1.bf16.msra.mxu0 0
        %1269 = vmatprep.subr.bf16.mxu0 0
        %1270 = vmatpush1.bf16.msra.mxu0 0
        %1271 = vmatprep.subr.bf16.mxu0 0
        %1272 = vmatpush1.bf16.msra.mxu0 0
        %1273 = vmatprep.subr.bf16.mxu0 0
        %1274 = vmatpush1.bf16.msra.mxu0 0
        %1275 = vmatprep.subr.bf16.mxu0 0
        %1276 = vmatpush1.bf16.msra.mxu0 0
        %1277 = vmatprep.subr.bf16.mxu0 0
        %1278 = vmatpush1.bf16.msra.mxu0 0
        %1279 = vmatprep.subr.bf16.mxu0 0
        %1280 = vmatpush1.bf16.msra.mxu0 0
        %1281 = vmatprep.subr.bf16.mxu0 0
        %1282 = vmatpush1.bf16.msra.mxu0 0
        %1283 = vmatprep.mubr.bf16.mxu0 0
        %1284 = vmatmul.mubr.bf16.gmra.mrb[0].mxu0 %v848
        %v1285 = vpop.f32.mrb[0].mxu0
        %v1286 = vadd.f32 %v918, %v1285
        %v1287 = vpop.f32.mrb[0].mxu0
        %v1288 = vadd.f32 %v922, %v1287
        %v1289 = vpop.f32.mrb[0].mxu0
        %v1290 = vpop.f32.mrb[0].mxu0
        %1291 = vdwg.mxu0
        %v1292 = vlaneseq
        %v1293 = vand.u32 %v1292, 127
        %v1294 = vadd.s32 %v1293, 128
        %v1295 = vadd.s32 %v1293, 256
        %v1296 = vadd.s32 %v1293, 384
        %v1297 = vadd.s32 %v1293, 512
        %v1298 = vadd.s32 %v1293, 640
        %s1299 = smul.u32 %s25, 768
        %v1300 = vstv %s1299
        %v1301 = vadd.s32 %v1293, %v1300
        %v1302 = vadd.s32 %v1294, %v1300
        %v1303 = vadd.s32 %v1295, %v1300
        %v1304 = vadd.s32 %v1296, %v1300
        %v1305 = vadd.s32 %v1297, %v1300
        %v1306 = vadd.s32 %v1298, %v1300
        %vm1307 = vcmp.lt.s32.totalorder %v1301, 720
        %vm1308 = vcmp.lt.s32.totalorder %v1302, 720
        %vm1309 = vcmp.lt.s32.totalorder %v1303, 720
        %vm1310 = vcmp.lt.s32.totalorder %v1304, 720
        %vm1311 = vcmp.lt.s32.totalorder %v1305, 720
        %vm1312 = vcmp.lt.s32.totalorder %v1306, 720
        %vm1313 = vcmp.ge.s32.totalorder %v1301, 724
        %vm1314 = vcmp.ge.s32.totalorder %v1302, 724
        %vm1315 = vcmp.ge.s32.totalorder %v1303, 724
        %vm1316 = vcmp.ge.s32.totalorder %v1304, 724
        %vm1317 = vcmp.ge.s32.totalorder %v1305, 724
        %vm1318 = vcmp.ge.s32.totalorder %v1306, 724
        %vm1319 = vcmp.lt.s32.totalorder %v1301, 1444
        %vm1320 = vcmp.lt.s32.totalorder %v1302, 1444
        %vm1321 = vcmp.lt.s32.totalorder %v1303, 1444
        %vm1322 = vcmp.lt.s32.totalorder %v1304, 1444
        %vm1323 = vcmp.lt.s32.totalorder %v1305, 1444
        %vm1324 = vcmp.lt.s32.totalorder %v1306, 1444
        %vm1325 = vmand %vm1313, %vm1319
        %vm1326 = vmand %vm1314, %vm1320
        %vm1327 = vmand %vm1315, %vm1321
        %vm1328 = vmand %vm1316, %vm1322
        %vm1329 = vmand %vm1317, %vm1323
        %vm1330 = vmand %vm1318, %vm1324
        %vm1331 = vmor %vm1307, %vm1325
        %vm1332 = vmor %vm1308, %vm1326
        %vm1333 = vmor %vm1309, %vm1327
        %vm1334 = vmor %vm1310, %vm1328
        %vm1335 = vmor %vm1311, %vm1329
        %vm1336 = vmor %vm1312, %vm1330
        %v1337 = vtanh.pop %v1204
        %v1338 = vtanh.pop %v1206
        %v1339 = vtanh.pop %v1245
        %v1340 = vtanh.pop %v1247
        %v1341 = vtanh.pop %v1286
        %v1342 = vtanh.pop %v1288
        %v1343 = vsel %vm1331, %v1337, %v1204
        %v1344 = vsel %vm1332, %v1338, %v1206
        %v1345 = vsel %vm1333, %v1339, %v1245
        %v1346 = vsel %vm1334, %v1340, %v1247
        %v1347 = vsel %vm1335, %v1341, %v1286
        %v1348 = vsel %vm1336, %v1342, %v1288
        %1349 = vst [vmem:[%s321] sm:$0xff] %v1343
        %1350 = vst [vmem:[%s321 + $0x8] sm:$0xff] %v1344
        %1351 = vst [vmem:[%s321 + $0x10] sm:$0xff] %v1345
        %1352 = vst [vmem:[%s321 + $0x18] sm:$0xff] %v1346
        %1353 = vst [vmem:[%s321 + $0x20] sm:$0xff] %v1347
        %1354 = vst [vmem:[%s321 + $0x28] sm:$0xff] %v1348
        %p1355 = scmp.eq.s32.totalorder %s25, 1
        // Predicated region
        $region49: #{model_forward.1} parent=39 // pred_check
          %p1356 = pneg %p1355
        $region50: #{model_forward.1} parent=39 // pred_check_branch
          %1358 = sbr.rel (%p1356) target = $region52
        $region51: #{model_forward.1} parent=39 // pred_region
          %v1359 = vadd.s32 %v1293, 1408
          %vm1360 = vcmp.eq.s32.totalorder %v1359, 1449
          %v1361 = vxor.u32 %v1288, 2147483648
          %v1362 = vmul.f32 %v1361, 1.442695
          %v1363 = vpow.pop %v1362
          %v1364 = vadd.f32 %v1363, 1.0
          %v1365 = vrcp.pop %v1364
          %v1366 = vmul.f32 1.0, %v1365
          %v1367 = vsel %vm1360, %v1366, %v1348
          %1368 = vst [vmem:[%s321 + $0x28] sm:$0xff] %v1367
        $region52: #{model_forward.1} parent=39 // pred_fallthru
          _
        %s1369 = smul.u32 6, %s25
        %p1370 = scmp.lt.s32.totalorder %s24, 0
        %s1371 = scalar_select %p1370, %s24, 0
        %p1372 = scmp.lt.s32.totalorder %s1369, 11
        %s1373 = scalar_select %p1372, %s1369, 11
        %s1374 = smul.addr %s1371, 12
        %s1375 = sadd.s32 %s1373, %s1374
        %s1376 = smul.addr %s1375, 8
        %s1377 = scalar_lea.vmem %s5, %s1376
        // Predicated region
        $region53: #{model_forward.1} parent=39 // pred_check
          %p1378 = pneg %p172
        $region54: #{model_forward.1} parent=39 // pred_check_branch
          %1380 = sbr.rel (%p1378) target = $region56
        $region55: #{model_forward.1} parent=39 // pred_region
          %s1381 = smul.u32 6, %s25
        $region56: #{model_forward.1} parent=39 // pred_fallthru
          _
      $region40: #{model_forward.1} parent=5 // pred_fallthru
        _
      %p1382 = scmp.le.s32.totalorder 2, %s15
      // Predicated region
      $region57: #{model_forward.1} parent=5 // pred_check
        %p1383 = pneg %p1382
      $region58: #{model_forward.1} parent=5 // pred_check_branch
        %1385 = sbr.rel (%p1383) target = $region60
      $region59: #{model_forward.1} parent=5 // pred_region
        %s1386 = ssub.s32 %s15, 2
        // Predicated region
        $region61: #{model_forward.1} parent=59 // pred_check
          %p1387 = pneg %p178
        $region62: #{model_forward.1} parent=59 // pred_check_branch
          %1389 = sbr.rel (%p1387) target = $region64
        $region63: #{model_forward.1} parent=59 // pred_region
          %s1390 = smul.u32 6, %s27
          %p1391 = scmp.lt.s32.totalorder %s26, 0
          %s1392 = scalar_select %p1391, %s26, 0
          %p1393 = scmp.lt.s32.totalorder %s1390, 11
          %s1394 = scalar_select %p1393, %s1390, 11
          %s1395 = smul.addr %s1392, 12
          %s1396 = sadd.s32 %s1394, %s1395
          %s1397 = smul.addr %s1396, 8
          %s1398 = scalar_lea.vmem %s5, %s1397
        $region64: #{model_forward.1} parent=59 // pred_fallthru
          _
      $region60: #{model_forward.1} parent=5 // pred_fallthru
        _
    $region6: #{model_forward.1} parent=1 // loop_footer
      %s19 = sadd.s32 1, %s15
    $region7: #{model_forward.1} parent=1 // loop_footer_branch
      %14 = sbr.rel target = $region3
    $region8: #{model_forward.1} parent=1 // loop_exit
      _
    %1399 = vsyncpa [#allocation3], 1
    %s1400 = scalar_lea.sflag [#allocation3], 1
    %1401 = vsyncpa %s1400, 1
    %1402 = vsyncpa [#allocation5], 1
    %s1403 = scalar_lea.sflag [#allocation5], 1
    %1404 = vsyncpa %s1403, 1

</llo_original>
